<compile_context>
chip_gen: v5e
topology: v5e:2x2
jax: 0.10.0
libtpu: 0.0.40
codegen_flags: <defaults>
</compile_context>

<pallas_src>
import functools

import jax
import jax.numpy as jnp
from jax.experimental import pallas as pl
from jax.experimental.pallas import tpu as pltpu


# ----------------------------------------------------------------------------
# Fused forward kernel.
#   ids   [bt, S] i32   attn [bt, S] i32   length [bt, 1] i32   feats [bt, F] f32
#   m1    [2*Vpad, Eb+Et]      bf16   (block-diag: bert_table ⊕ text_table)
#   m2    [Eb+Et+F, Db+Dt+Df]  bf16   (block-diag: bert_w ⊕ text_w ⊕ feat_w)
#   b_cat [1, Db+Dt+Df] f32    d_w1 [Db+Dt+Df, H] bf16   d_b1 [1, H] f32
#   d_w2_row [1, H] f32        d_b2 [1, 1] f32
#   -> prob [bt, 1] f32
# ----------------------------------------------------------------------------
def _fused_kernel(ids_ref, attn_ref, len_ref, feat_ref,
                  m1_ref, m2_ref, bcat_ref,
                  w1_ref, b1_ref, w2_ref, b2_ref,
                  prob_ref, *, n_bert, n_text):
    ids = ids_ref[...]                                     # (bt, S) int32
    attn = attn_ref[...].astype(jnp.float32)               # (bt, S) f32
    lens = len_ref[...]                                    # (bt, 1) int32
    feats = feat_ref[...].astype(jnp.float32)              # (bt, F) f32

    bt, seq = ids.shape
    vpad = m1_ref.shape[0] // 2                            # lane-padded vocab (mult of 128)

    # ---- fused embedding gather + masked sum-pool (bag-of-words accumulate) ----
    # Per token position: one (bt, vpad) compare, two fused accumulates.  No (bt,S,V)
    # temporary is ever materialized; everything stays in a few dozen vregs.
    iota_v = jax.lax.broadcasted_iota(jnp.int32, (1, vpad), 1)
    bow_a = jnp.zeros((bt, vpad), jnp.float32)             # attention-mask weighted counts
    bow_l = jnp.zeros((bt, vpad), jnp.float32)             # length-mask weighted counts
    for s in range(seq):                                   # seq is small & static -> unrolled
        hit = ids[:, s:s + 1] == iota_v                    # (bt, vpad) bool
        bow_a = bow_a + jnp.where(hit, attn[:, s:s + 1], 0.0)
        bow_l = bow_l + jnp.where(hit, (lens > s).astype(jnp.float32), 0.0)

    # ---- matmul 1: both pooled branches at once via block-diagonal table (bf16 MXU) ----
    x1 = jnp.concatenate([bow_a, bow_l], axis=1).astype(jnp.bfloat16)     # (bt, 2*vpad)
    pooled = jnp.dot(x1, m1_ref[...], preferred_element_type=jnp.float32)  # (bt, Eb+Et) un-normalized

    # ---- matmul 2: all three branch projections via block-diagonal weights ----
    x2 = jnp.concatenate([pooled, feats], axis=1).astype(jnp.bfloat16)     # (bt, Eb+Et+F)
    pre = jnp.dot(x2, m2_ref[...], preferred_element_type=jnp.float32)     # (bt, Db+Dt+Df)

    # Deferred mean-pool normalization (valid because m1/m2 are block-diagonal).
    denom_a = jnp.maximum(jnp.sum(attn, axis=-1, keepdims=True), 1.0)      # (bt, 1)
    denom_l = jnp.clip(lens.astype(jnp.float32), 1.0, float(seq))          # (bt, 1)
    inv_a = pl.reciprocal(denom_a, approx=True)                            # EUP slot
    inv_l = pl.reciprocal(denom_l, approx=True)
    col = jax.lax.broadcasted_iota(jnp.int32, (1, pre.shape[1]), 1)
    inv_cat = jnp.where(col < n_bert, inv_a,
                        jnp.where(col < n_bert + n_text, inv_l, 1.0))       # (bt, Dc)
    z = pre * inv_cat + bcat_ref[...]
    # tanh for the two text branches, relu for the feature branch (one lane-mask select).
    emb = jnp.where(col < n_bert + n_text, jnp.tanh(z), jnp.maximum(z, 0.0))

    # ---- dense head ----
    h = jnp.dot(emb.astype(jnp.bfloat16), w1_ref[...],
                preferred_element_type=jnp.float32) + b1_ref[...]
    h = jnp.maximum(h, 0.0)                                                 # (bt, H)
    # H -> 1 projection on the VPU/XLU (multiply + lane reduce): no N=1 MXU matmul.
    logit = jnp.sum(h * w2_ref[...], axis=-1, keepdims=True) + b2_ref[...]  # (bt, 1)
    prob_ref[...] = jax.nn.sigmoid(logit).astype(prob_ref.dtype)


def _batch_tile(B, max_tile=128):
    """Batch tile: full dim if tiny, else a multiple of 8 sized so grid >= 2 (v7x 2 TCs)."""
    if B <= 8:
        return B                          # full-dim block is always legal
    half = -(-B // 2)                     # ceil(B / 2) -> at least 2 grid steps
    return min(max_tile, ((half + 7) // 8) * 8)


def fused_forward(input_ids, attention_mask, length, feature_inputs, p):
    B, S = input_ids.shape
    F = feature_inputs.shape[1]
    K1, E2 = p["m1"].shape            # (2*Vpad, Eb+Et)
    Dc_in, Dc = p["m2"].shape         # (Eb+Et+F, Db+Dt+Df)
    H = p["d_w1"].shape[1]

    bt = _batch_tile(B)
    grid = (pl.cdiv(B, bt),)          # ragged last tile is padded by Pallas (rows masked on store)
    bmap = lambda i: (i, 0)           # batch-tiled operands
    wmap = lambda i: (0, 0)           # weights: resident, same block every step

    kernel = functools.partial(_fused_kernel, n_bert=p["n_bert"], n_text=p["n_text"])

    return pl.pallas_call(
        kernel,
        out_shape=jax.ShapeDtypeStruct((B, 1), jnp.float32),
        grid=grid,
        in_specs=[
            pl.BlockSpec((bt, S), bmap),          # input_ids
            pl.BlockSpec((bt, S), bmap),          # attention_mask
            pl.BlockSpec((bt, 1), bmap),          # length
            pl.BlockSpec((bt, F), bmap),          # feature_inputs
            pl.BlockSpec((K1, E2), wmap),         # m1 (block-diag embedding tables)
            pl.BlockSpec((Dc_in, Dc), wmap),      # m2 (block-diag branch projections)
            pl.BlockSpec((1, Dc), wmap),          # b_cat
            pl.BlockSpec((Dc, H), wmap),          # d_w1
            pl.BlockSpec((1, H), wmap),           # d_b1
            pl.BlockSpec((1, H), wmap),           # d_w2 (stored as a row for the VPU reduce)
            pl.BlockSpec((1, 1), wmap),           # d_b2
        ],
        out_specs=pl.BlockSpec((bt, 1), bmap),
        compiler_params=pltpu.CompilerParams(
            dimension_semantics=("parallel",),    # batch tiles shard across TCs (v7x)
            vmem_limit_bytes=32 * 1024 * 1024,
        ),
    )(input_ids.astype(jnp.int32), attention_mask.astype(jnp.int32),
      length.reshape(B, 1).astype(jnp.int32), feature_inputs.astype(jnp.float32),
      p["m1"], p["m2"], p["b_cat"],
      p["d_w1"], p["d_b1"], p["d_w2_row"], p["d_b2"])


# ----------------------------------------------------------------------------
# Model wrapper: parameter setup (incl. host-side block-diagonal weight merging)
# in plain JAX; all per-example compute in the single fused kernel.
# ----------------------------------------------------------------------------
class FakeNewsBinaryModelPallas:
    def __init__(self, batch_size, *, vocab_size=100, seq_len=8,
                 bert_emb=32, bert_dim=32, text_emb=32, text_dim=32,
                 num_features=16, feat_dim=16, hidden=32, seed=0):
        self.batch_size = batch_size
        self.seq_len = seq_len
        ks = jax.random.split(jax.random.PRNGKey(seed), 8)
        s = 0.05

        bert_table = s * jax.random.normal(ks[0], (vocab_size, bert_emb), jnp.float32)
        bert_w = s * jax.random.normal(ks[1], (bert_emb, bert_dim), jnp.float32)
        text_table = s * jax.random.normal(ks[2], (vocab_size, text_emb), jnp.float32)
        text_w = s * jax.random.normal(ks[3], (text_emb, text_dim), jnp.float32)
        feat_w = s * jax.random.normal(ks[4], (num_features, feat_dim), jnp.float32)
        d_w1 = s * jax.random.normal(ks[5], (bert_dim + text_dim + feat_dim, hidden), jnp.float32)
        d_w2 = s * jax.random.normal(ks[6], (1, hidden), jnp.float32)

        # Block-diagonal merge of the two embedding tables (lane-padded vocab).
        vpad = ((vocab_size + 127) // 128) * 128
        m1 = jnp.zeros((2 * vpad, bert_emb + text_emb), jnp.float32)
        m1 = m1.at[:vocab_size, :bert_emb].set(bert_table)
        m1 = m1.at[vpad:vpad + vocab_size, bert_emb:].set(text_table)

        # Block-diagonal merge of the three branch projections.
        dc_in = bert_emb + text_emb + num_features
        dc = bert_dim + text_dim + feat_dim
        m2 = jnp.zeros((dc_in, dc), jnp.float32)
        m2 = m2.at[:bert_emb, :bert_dim].set(bert_w)
        m2 = m2.at[bert_emb:bert_emb + text_emb, bert_dim:bert_dim + text_dim].set(text_w)
        m2 = m2.at[bert_emb + text_emb:, bert_dim + text_dim:].set(feat_w)

        self.params = {
            "m1": m1.astype(jnp.bfloat16),                 # bf16 MXU operands
            "m2": m2.astype(jnp.bfloat16),
            "b_cat": jnp.zeros((1, dc), jnp.float32),      # [bert_b | text_b | feat_b]
            "d_w1": d_w1.astype(jnp.bfloat16),
            "d_b1": jnp.zeros((1, hidden), jnp.float32),
            "d_w2_row": d_w2.astype(jnp.float32),          # used on the VPU -> keep f32
            "d_b2": jnp.zeros((1, 1), jnp.float32),
            "n_bert": bert_dim,                            # static split points (lane selects)
            "n_text": text_dim,
        }

    def __call__(self, input_ids, attention_mask, length, feature_inputs):
        return fused_forward(input_ids, attention_mask, length, feature_inputs, self.params)


if __name__ == "__main__":
    B, S, F = 2, 8, 16
    key = jax.random.PRNGKey(0)
    k1, k2 = jax.random.split(key)
    input_ids = jax.random.randint(k1, (B, S), 0, 100, dtype=jnp.int32)
    length = jnp.array([8, 5], dtype=jnp.int32)
    attention_mask = (jnp.arange(S)[None, :] < length[:, None]).astype(jnp.int32)
    feature_inputs = jax.random.normal(k2, (B, F), jnp.float32)

    model = FakeNewsBinaryModelPallas(batch_size=B, seq_len=S, num_features=F)
    prob = model(input_ids, attention_mask, length, feature_inputs)
    prob = jax.block_until_ready(prob)
    assert prob.shape == (B, 1)
    assert bool(jnp.all((prob >= 0.0) & (prob <= 1.0)))
    print("KERNEL_OK")
</pallas_src>

<mosaic_0001>
module attributes {stable_mosaic.version = 11 : i64} {
  func.func @_fused_kernel(%arg0: i32, %arg1: memref<2x8xi32, #tpu.memory_space<vmem>>, %arg2: memref<2x8xi32, #tpu.memory_space<vmem>>, %arg3: memref<2x1xi32, #tpu.memory_space<vmem>>, %arg4: memref<2x16xf32, #tpu.memory_space<vmem>>, %arg5: memref<256x64xbf16, #tpu.memory_space<vmem>>, %arg6: memref<80x80xbf16, #tpu.memory_space<vmem>>, %arg7: memref<1x80xf32, #tpu.memory_space<vmem>>, %arg8: memref<80x32xbf16, #tpu.memory_space<vmem>>, %arg9: memref<1x32xf32, #tpu.memory_space<vmem>>, %arg10: memref<1x32xf32, #tpu.memory_space<vmem>>, %arg11: memref<1x1xf32, #tpu.memory_space<vmem>>, %arg12: memref<2x1xf32, #tpu.memory_space<vmem>>) attributes {dimension_semantics = [#tpu.dimension_semantics<parallel>], iteration_bounds = array<i64: 1>, scalar_prefetch = 0 : i64, scratch_operands = 0 : i64, tpu.core_type = #tpu.core_type<tc>, window_params = [{transform_indices = @transform_0, window_bounds = array<i64: 2, 8>}, {transform_indices = @transform_1, window_bounds = array<i64: 2, 8>}, {transform_indices = @transform_2, window_bounds = array<i64: 2, 1>}, {transform_indices = @transform_3, window_bounds = array<i64: 2, 16>}, {pipeline_mode = #tpu.pipeline_mode<synchronous>, transform_indices = @transform_4, window_bounds = array<i64: 256, 64>}, {pipeline_mode = #tpu.pipeline_mode<synchronous>, transform_indices = @transform_5, window_bounds = array<i64: 80, 80>}, {pipeline_mode = #tpu.pipeline_mode<synchronous>, transform_indices = @transform_6, window_bounds = array<i64: 1, 80>}, {pipeline_mode = #tpu.pipeline_mode<synchronous>, transform_indices = @transform_7, window_bounds = array<i64: 80, 32>}, {pipeline_mode = #tpu.pipeline_mode<synchronous>, transform_indices = @transform_8, window_bounds = array<i64: 1, 32>}, {pipeline_mode = #tpu.pipeline_mode<synchronous>, transform_indices = @transform_9, window_bounds = array<i64: 1, 32>}, {pipeline_mode = #tpu.pipeline_mode<synchronous>, transform_indices = @transform_10, window_bounds = array<i64: 1, 1>}, {transform_indices = @transform_11, window_bounds = array<i64: 2, 1>}]} {
    %c0 = arith.constant 0 : index
    %c0_0 = arith.constant 0 : index
    %0 = vector.load %arg1[%c0, %c0_0] : memref<2x8xi32, #tpu.memory_space<vmem>>, vector<2x8xi32>
    %c0_1 = arith.constant 0 : index
    %c0_2 = arith.constant 0 : index
    %1 = vector.load %arg2[%c0_1, %c0_2] : memref<2x8xi32, #tpu.memory_space<vmem>>, vector<2x8xi32>
    %2 = arith.sitofp %1 : vector<2x8xi32> to vector<2x8xf32>
    %c0_3 = arith.constant 0 : index
    %c0_4 = arith.constant 0 : index
    %3 = vector.load %arg3[%c0_3, %c0_4] : memref<2x1xi32, #tpu.memory_space<vmem>>, vector<2x1xi32>
    %c0_5 = arith.constant 0 : index
    %c0_6 = arith.constant 0 : index
    %4 = vector.load %arg4[%c0_5, %c0_6] : memref<2x16xf32, #tpu.memory_space<vmem>>, vector<2x16xf32>
    %5 = tpu.iota {dimensions = array<i32: 1>} : vector<1x128xi32>
    %cst = arith.constant 0.000000e+00 : f32
    %6 = vector.broadcast %cst : f32 to vector<2x128xf32>
    %cst_7 = arith.constant 0.000000e+00 : f32
    %7 = vector.broadcast %cst_7 : f32 to vector<2x128xf32>
    %8 = vector.extract_strided_slice %0 {offsets = [0, 0], sizes = [2, 1], strides = [1, 1]} : vector<2x8xi32> to vector<2x1xi32>
    %9 = vector.broadcast %8 : vector<2x1xi32> to vector<2x128xi32>
    %10 = vector.broadcast %5 : vector<1x128xi32> to vector<2x128xi32>
    %11 = arith.cmpi eq, %9, %10 : vector<2x128xi32>
    %12 = vector.extract_strided_slice %2 {offsets = [0, 0], sizes = [2, 1], strides = [1, 1]} : vector<2x8xf32> to vector<2x1xf32>
    %cst_8 = arith.constant 0.000000e+00 : f32
    %13 = vector.shape_cast %12 : vector<2x1xf32> to vector<2x1xf32>
    %14 = vector.broadcast %13 : vector<2x1xf32> to vector<2x128xf32>
    %15 = vector.broadcast %cst_8 : f32 to vector<2x128xf32>
    %16 = arith.select %11, %14, %15 : vector<2x128xi1>, vector<2x128xf32>
    %17 = arith.addf %6, %16 : vector<2x128xf32>
    %c0_i32 = arith.constant 0 : i32
    %18 = vector.broadcast %c0_i32 : i32 to vector<2x1xi32>
    %19 = arith.cmpi sgt, %3, %18 : vector<2x1xi32>
    %20 = arith.extui %19 : vector<2x1xi1> to vector<2x1xi32>
    %21 = arith.sitofp %20 : vector<2x1xi32> to vector<2x1xf32>
    %cst_9 = arith.constant 0.000000e+00 : f32
    %22 = vector.shape_cast %21 : vector<2x1xf32> to vector<2x1xf32>
    %23 = vector.broadcast %22 : vector<2x1xf32> to vector<2x128xf32>
    %24 = vector.broadcast %cst_9 : f32 to vector<2x128xf32>
    %25 = arith.select %11, %23, %24 : vector<2x128xi1>, vector<2x128xf32>
    %26 = arith.addf %7, %25 : vector<2x128xf32>
    %27 = vector.extract_strided_slice %0 {offsets = [0, 1], sizes = [2, 1], strides = [1, 1]} : vector<2x8xi32> to vector<2x1xi32>
    %28 = vector.broadcast %27 : vector<2x1xi32> to vector<2x128xi32>
    %29 = vector.broadcast %5 : vector<1x128xi32> to vector<2x128xi32>
    %30 = arith.cmpi eq, %28, %29 : vector<2x128xi32>
    %31 = vector.extract_strided_slice %2 {offsets = [0, 1], sizes = [2, 1], strides = [1, 1]} : vector<2x8xf32> to vector<2x1xf32>
    %cst_10 = arith.constant 0.000000e+00 : f32
    %32 = vector.shape_cast %31 : vector<2x1xf32> to vector<2x1xf32>
    %33 = vector.broadcast %32 : vector<2x1xf32> to vector<2x128xf32>
    %34 = vector.broadcast %cst_10 : f32 to vector<2x128xf32>
    %35 = arith.select %30, %33, %34 : vector<2x128xi1>, vector<2x128xf32>
    %36 = arith.addf %17, %35 : vector<2x128xf32>
    %c1_i32 = arith.constant 1 : i32
    %37 = vector.broadcast %c1_i32 : i32 to vector<2x1xi32>
    %38 = arith.cmpi sgt, %3, %37 : vector<2x1xi32>
    %39 = arith.extui %38 : vector<2x1xi1> to vector<2x1xi32>
    %40 = arith.sitofp %39 : vector<2x1xi32> to vector<2x1xf32>
    %cst_11 = arith.constant 0.000000e+00 : f32
    %41 = vector.shape_cast %40 : vector<2x1xf32> to vector<2x1xf32>
    %42 = vector.broadcast %41 : vector<2x1xf32> to vector<2x128xf32>
    %43 = vector.broadcast %cst_11 : f32 to vector<2x128xf32>
    %44 = arith.select %30, %42, %43 : vector<2x128xi1>, vector<2x128xf32>
    %45 = arith.addf %26, %44 : vector<2x128xf32>
    %46 = vector.extract_strided_slice %0 {offsets = [0, 2], sizes = [2, 1], strides = [1, 1]} : vector<2x8xi32> to vector<2x1xi32>
    %47 = vector.broadcast %46 : vector<2x1xi32> to vector<2x128xi32>
    %48 = vector.broadcast %5 : vector<1x128xi32> to vector<2x128xi32>
    %49 = arith.cmpi eq, %47, %48 : vector<2x128xi32>
    %50 = vector.extract_strided_slice %2 {offsets = [0, 2], sizes = [2, 1], strides = [1, 1]} : vector<2x8xf32> to vector<2x1xf32>
    %cst_12 = arith.constant 0.000000e+00 : f32
    %51 = vector.shape_cast %50 : vector<2x1xf32> to vector<2x1xf32>
    %52 = vector.broadcast %51 : vector<2x1xf32> to vector<2x128xf32>
    %53 = vector.broadcast %cst_12 : f32 to vector<2x128xf32>
    %54 = arith.select %49, %52, %53 : vector<2x128xi1>, vector<2x128xf32>
    %55 = arith.addf %36, %54 : vector<2x128xf32>
    %c2_i32 = arith.constant 2 : i32
    %56 = vector.broadcast %c2_i32 : i32 to vector<2x1xi32>
    %57 = arith.cmpi sgt, %3, %56 : vector<2x1xi32>
    %58 = arith.extui %57 : vector<2x1xi1> to vector<2x1xi32>
    %59 = arith.sitofp %58 : vector<2x1xi32> to vector<2x1xf32>
    %cst_13 = arith.constant 0.000000e+00 : f32
    %60 = vector.shape_cast %59 : vector<2x1xf32> to vector<2x1xf32>
    %61 = vector.broadcast %60 : vector<2x1xf32> to vector<2x128xf32>
    %62 = vector.broadcast %cst_13 : f32 to vector<2x128xf32>
    %63 = arith.select %49, %61, %62 : vector<2x128xi1>, vector<2x128xf32>
    %64 = arith.addf %45, %63 : vector<2x128xf32>
    %65 = vector.extract_strided_slice %0 {offsets = [0, 3], sizes = [2, 1], strides = [1, 1]} : vector<2x8xi32> to vector<2x1xi32>
    %66 = vector.broadcast %65 : vector<2x1xi32> to vector<2x128xi32>
    %67 = vector.broadcast %5 : vector<1x128xi32> to vector<2x128xi32>
    %68 = arith.cmpi eq, %66, %67 : vector<2x128xi32>
    %69 = vector.extract_strided_slice %2 {offsets = [0, 3], sizes = [2, 1], strides = [1, 1]} : vector<2x8xf32> to vector<2x1xf32>
    %cst_14 = arith.constant 0.000000e+00 : f32
    %70 = vector.shape_cast %69 : vector<2x1xf32> to vector<2x1xf32>
    %71 = vector.broadcast %70 : vector<2x1xf32> to vector<2x128xf32>
    %72 = vector.broadcast %cst_14 : f32 to vector<2x128xf32>
    %73 = arith.select %68, %71, %72 : vector<2x128xi1>, vector<2x128xf32>
    %74 = arith.addf %55, %73 : vector<2x128xf32>
    %c3_i32 = arith.constant 3 : i32
    %75 = vector.broadcast %c3_i32 : i32 to vector<2x1xi32>
    %76 = arith.cmpi sgt, %3, %75 : vector<2x1xi32>
    %77 = arith.extui %76 : vector<2x1xi1> to vector<2x1xi32>
    %78 = arith.sitofp %77 : vector<2x1xi32> to vector<2x1xf32>
    %cst_15 = arith.constant 0.000000e+00 : f32
    %79 = vector.shape_cast %78 : vector<2x1xf32> to vector<2x1xf32>
    %80 = vector.broadcast %79 : vector<2x1xf32> to vector<2x128xf32>
    %81 = vector.broadcast %cst_15 : f32 to vector<2x128xf32>
    %82 = arith.select %68, %80, %81 : vector<2x128xi1>, vector<2x128xf32>
    %83 = arith.addf %64, %82 : vector<2x128xf32>
    %84 = vector.extract_strided_slice %0 {offsets = [0, 4], sizes = [2, 1], strides = [1, 1]} : vector<2x8xi32> to vector<2x1xi32>
    %85 = vector.broadcast %84 : vector<2x1xi32> to vector<2x128xi32>
    %86 = vector.broadcast %5 : vector<1x128xi32> to vector<2x128xi32>
    %87 = arith.cmpi eq, %85, %86 : vector<2x128xi32>
    %88 = vector.extract_strided_slice %2 {offsets = [0, 4], sizes = [2, 1], strides = [1, 1]} : vector<2x8xf32> to vector<2x1xf32>
    %cst_16 = arith.constant 0.000000e+00 : f32
    %89 = vector.shape_cast %88 : vector<2x1xf32> to vector<2x1xf32>
    %90 = vector.broadcast %89 : vector<2x1xf32> to vector<2x128xf32>
    %91 = vector.broadcast %cst_16 : f32 to vector<2x128xf32>
    %92 = arith.select %87, %90, %91 : vector<2x128xi1>, vector<2x128xf32>
    %93 = arith.addf %74, %92 : vector<2x128xf32>
    %c4_i32 = arith.constant 4 : i32
    %94 = vector.broadcast %c4_i32 : i32 to vector<2x1xi32>
    %95 = arith.cmpi sgt, %3, %94 : vector<2x1xi32>
    %96 = arith.extui %95 : vector<2x1xi1> to vector<2x1xi32>
    %97 = arith.sitofp %96 : vector<2x1xi32> to vector<2x1xf32>
    %cst_17 = arith.constant 0.000000e+00 : f32
    %98 = vector.shape_cast %97 : vector<2x1xf32> to vector<2x1xf32>
    %99 = vector.broadcast %98 : vector<2x1xf32> to vector<2x128xf32>
    %100 = vector.broadcast %cst_17 : f32 to vector<2x128xf32>
    %101 = arith.select %87, %99, %100 : vector<2x128xi1>, vector<2x128xf32>
    %102 = arith.addf %83, %101 : vector<2x128xf32>
    %103 = vector.extract_strided_slice %0 {offsets = [0, 5], sizes = [2, 1], strides = [1, 1]} : vector<2x8xi32> to vector<2x1xi32>
    %104 = vector.broadcast %103 : vector<2x1xi32> to vector<2x128xi32>
    %105 = vector.broadcast %5 : vector<1x128xi32> to vector<2x128xi32>
    %106 = arith.cmpi eq, %104, %105 : vector<2x128xi32>
    %107 = vector.extract_strided_slice %2 {offsets = [0, 5], sizes = [2, 1], strides = [1, 1]} : vector<2x8xf32> to vector<2x1xf32>
    %cst_18 = arith.constant 0.000000e+00 : f32
    %108 = vector.shape_cast %107 : vector<2x1xf32> to vector<2x1xf32>
    %109 = vector.broadcast %108 : vector<2x1xf32> to vector<2x128xf32>
    %110 = vector.broadcast %cst_18 : f32 to vector<2x128xf32>
    %111 = arith.select %106, %109, %110 : vector<2x128xi1>, vector<2x128xf32>
    %112 = arith.addf %93, %111 : vector<2x128xf32>
    %c5_i32 = arith.constant 5 : i32
    %113 = vector.broadcast %c5_i32 : i32 to vector<2x1xi32>
    %114 = arith.cmpi sgt, %3, %113 : vector<2x1xi32>
    %115 = arith.extui %114 : vector<2x1xi1> to vector<2x1xi32>
    %116 = arith.sitofp %115 : vector<2x1xi32> to vector<2x1xf32>
    %cst_19 = arith.constant 0.000000e+00 : f32
    %117 = vector.shape_cast %116 : vector<2x1xf32> to vector<2x1xf32>
    %118 = vector.broadcast %117 : vector<2x1xf32> to vector<2x128xf32>
    %119 = vector.broadcast %cst_19 : f32 to vector<2x128xf32>
    %120 = arith.select %106, %118, %119 : vector<2x128xi1>, vector<2x128xf32>
    %121 = arith.addf %102, %120 : vector<2x128xf32>
    %122 = vector.extract_strided_slice %0 {offsets = [0, 6], sizes = [2, 1], strides = [1, 1]} : vector<2x8xi32> to vector<2x1xi32>
    %123 = vector.broadcast %122 : vector<2x1xi32> to vector<2x128xi32>
    %124 = vector.broadcast %5 : vector<1x128xi32> to vector<2x128xi32>
    %125 = arith.cmpi eq, %123, %124 : vector<2x128xi32>
    %126 = vector.extract_strided_slice %2 {offsets = [0, 6], sizes = [2, 1], strides = [1, 1]} : vector<2x8xf32> to vector<2x1xf32>
    %cst_20 = arith.constant 0.000000e+00 : f32
    %127 = vector.shape_cast %126 : vector<2x1xf32> to vector<2x1xf32>
    %128 = vector.broadcast %127 : vector<2x1xf32> to vector<2x128xf32>
    %129 = vector.broadcast %cst_20 : f32 to vector<2x128xf32>
    %130 = arith.select %125, %128, %129 : vector<2x128xi1>, vector<2x128xf32>
    %131 = arith.addf %112, %130 : vector<2x128xf32>
    %c6_i32 = arith.constant 6 : i32
    %132 = vector.broadcast %c6_i32 : i32 to vector<2x1xi32>
    %133 = arith.cmpi sgt, %3, %132 : vector<2x1xi32>
    %134 = arith.extui %133 : vector<2x1xi1> to vector<2x1xi32>
    %135 = arith.sitofp %134 : vector<2x1xi32> to vector<2x1xf32>
    %cst_21 = arith.constant 0.000000e+00 : f32
    %136 = vector.shape_cast %135 : vector<2x1xf32> to vector<2x1xf32>
    %137 = vector.broadcast %136 : vector<2x1xf32> to vector<2x128xf32>
    %138 = vector.broadcast %cst_21 : f32 to vector<2x128xf32>
    %139 = arith.select %125, %137, %138 : vector<2x128xi1>, vector<2x128xf32>
    %140 = arith.addf %121, %139 : vector<2x128xf32>
    %141 = vector.extract_strided_slice %0 {offsets = [0, 7], sizes = [2, 1], strides = [1, 1]} : vector<2x8xi32> to vector<2x1xi32>
    %142 = vector.broadcast %141 : vector<2x1xi32> to vector<2x128xi32>
    %143 = vector.broadcast %5 : vector<1x128xi32> to vector<2x128xi32>
    %144 = arith.cmpi eq, %142, %143 : vector<2x128xi32>
    %145 = vector.extract_strided_slice %2 {offsets = [0, 7], sizes = [2, 1], strides = [1, 1]} : vector<2x8xf32> to vector<2x1xf32>
    %cst_22 = arith.constant 0.000000e+00 : f32
    %146 = vector.shape_cast %145 : vector<2x1xf32> to vector<2x1xf32>
    %147 = vector.broadcast %146 : vector<2x1xf32> to vector<2x128xf32>
    %148 = vector.broadcast %cst_22 : f32 to vector<2x128xf32>
    %149 = arith.select %144, %147, %148 : vector<2x128xi1>, vector<2x128xf32>
    %150 = arith.addf %131, %149 : vector<2x128xf32>
    %c7_i32 = arith.constant 7 : i32
    %151 = vector.broadcast %c7_i32 : i32 to vector<2x1xi32>
    %152 = arith.cmpi sgt, %3, %151 : vector<2x1xi32>
    %153 = arith.extui %152 : vector<2x1xi1> to vector<2x1xi32>
    %154 = arith.sitofp %153 : vector<2x1xi32> to vector<2x1xf32>
    %cst_23 = arith.constant 0.000000e+00 : f32
    %155 = vector.shape_cast %154 : vector<2x1xf32> to vector<2x1xf32>
    %156 = vector.broadcast %155 : vector<2x1xf32> to vector<2x128xf32>
    %157 = vector.broadcast %cst_23 : f32 to vector<2x128xf32>
    %158 = arith.select %144, %156, %157 : vector<2x128xi1>, vector<2x128xf32>
    %159 = arith.addf %140, %158 : vector<2x128xf32>
    %160 = tpu.concatenate %150, %159 in 1 : vector<2x128xf32>, vector<2x128xf32> -> vector<2x256xf32>
    %161 = arith.truncf %160 : vector<2x256xf32> to vector<2x256xbf16>
    %c0_24 = arith.constant 0 : index
    %c0_25 = arith.constant 0 : index
    %162 = vector.load %arg5[%c0_24, %c0_25] : memref<256x64xbf16, #tpu.memory_space<vmem>>, vector<256x64xbf16>
    %cst_26 = arith.constant dense<0.000000e+00> : vector<2x64xf32>
    %163 = tpu.matmul %161, %162, %cst_26 {dimension_numbers = #tpu.dot_dimension_numbers<[1], [0], [0], [1], [0, 0, 1, 1], [], []>} : vector<2x256xbf16>, vector<256x64xbf16>, vector<2x64xf32> -> vector<2x64xf32>
    %164 = tpu.concatenate %163, %4 in 1 : vector<2x64xf32>, vector<2x16xf32> -> vector<2x80xf32>
    %165 = arith.truncf %164 : vector<2x80xf32> to vector<2x80xbf16>
    %c0_27 = arith.constant 0 : index
    %c0_28 = arith.constant 0 : index
    %166 = vector.load %arg6[%c0_27, %c0_28] : memref<80x80xbf16, #tpu.memory_space<vmem>>, vector<80x80xbf16>
    %cst_29 = arith.constant dense<0.000000e+00> : vector<2x80xf32>
    %167 = tpu.matmul %165, %166, %cst_29 {dimension_numbers = #tpu.dot_dimension_numbers<[1], [0], [0], [1], [0, 0, 1, 1], [], []>} : vector<2x80xbf16>, vector<80x80xbf16>, vector<2x80xf32> -> vector<2x80xf32>
    %cst_30 = arith.constant dense<0.000000e+00> : vector<2xf32>
    %168 = vector.multi_reduction <add>, %2, %cst_30 [1] : vector<2x8xf32> to vector<2xf32>
    %169 = vector.shape_cast %168 : vector<2xf32> to vector<2x1xf32>
    %cst_31 = arith.constant 1.000000e+00 : f32
    %170 = vector.broadcast %cst_31 : f32 to vector<2x1xf32>
    %171 = arith.maximumf %169, %170 : vector<2x1xf32>
    %172 = arith.sitofp %3 : vector<2x1xi32> to vector<2x1xf32>
    %cst_32 = arith.constant 1.000000e+00 : f32
    %cst_33 = arith.constant 8.000000e+00 : f32
    %173 = vector.broadcast %cst_32 : f32 to vector<2x1xf32>
    %174 = arith.maximumf %173, %172 : vector<2x1xf32>
    %175 = vector.broadcast %cst_33 : f32 to vector<2x1xf32>
    %176 = arith.minimumf %175, %174 : vector<2x1xf32>
    %177 = tpu.reciprocal %171 {approx = true} : vector<2x1xf32> -> vector<2x1xf32>
    %178 = tpu.reciprocal %176 {approx = true} : vector<2x1xf32> -> vector<2x1xf32>
    %179 = tpu.iota {dimensions = array<i32: 1>} : vector<1x80xi32>
    %c32_i32 = arith.constant 32 : i32
    %180 = vector.broadcast %c32_i32 : i32 to vector<1x80xi32>
    %181 = arith.cmpi slt, %179, %180 : vector<1x80xi32>
    %c64_i32 = arith.constant 64 : i32
    %182 = vector.broadcast %c64_i32 : i32 to vector<1x80xi32>
    %183 = arith.cmpi slt, %179, %182 : vector<1x80xi32>
    %cst_34 = arith.constant 1.000000e+00 : f32
    %184 = vector.shape_cast %183 : vector<1x80xi1> to vector<1x80xi1>
    %185 = vector.broadcast %184 : vector<1x80xi1> to vector<2x80xi1>
    %186 = vector.shape_cast %178 : vector<2x1xf32> to vector<2x1xf32>
    %187 = vector.broadcast %186 : vector<2x1xf32> to vector<2x80xf32>
    %188 = vector.broadcast %cst_34 : f32 to vector<2x80xf32>
    %189 = arith.select %185, %187, %188 : vector<2x80xi1>, vector<2x80xf32>
    %190 = vector.shape_cast %181 : vector<1x80xi1> to vector<1x80xi1>
    %191 = vector.broadcast %190 : vector<1x80xi1> to vector<2x80xi1>
    %192 = vector.shape_cast %177 : vector<2x1xf32> to vector<2x1xf32>
    %193 = vector.broadcast %192 : vector<2x1xf32> to vector<2x80xf32>
    %194 = arith.select %191, %193, %189 : vector<2x80xi1>, vector<2x80xf32>
    %195 = arith.mulf %167, %194 : vector<2x80xf32>
    %c0_35 = arith.constant 0 : index
    %c0_36 = arith.constant 0 : index
    %196 = vector.load %arg7[%c0_35, %c0_36] : memref<1x80xf32, #tpu.memory_space<vmem>>, vector<1x80xf32>
    %197 = vector.broadcast %196 : vector<1x80xf32> to vector<2x80xf32>
    %198 = arith.addf %195, %197 : vector<2x80xf32>
    %c64_i32_37 = arith.constant 64 : i32
    %199 = vector.broadcast %c64_i32_37 : i32 to vector<1x80xi32>
    %200 = arith.cmpi slt, %179, %199 : vector<1x80xi32>
    %201 = math.tanh %198 : vector<2x80xf32>
    %cst_38 = arith.constant 0.000000e+00 : f32
    %202 = vector.broadcast %cst_38 : f32 to vector<2x80xf32>
    %203 = arith.maximumf %198, %202 : vector<2x80xf32>
    %204 = vector.shape_cast %200 : vector<1x80xi1> to vector<1x80xi1>
    %205 = vector.broadcast %204 : vector<1x80xi1> to vector<2x80xi1>
    %206 = arith.select %205, %201, %203 : vector<2x80xi1>, vector<2x80xf32>
    %207 = arith.truncf %206 : vector<2x80xf32> to vector<2x80xbf16>
    %c0_39 = arith.constant 0 : index
    %c0_40 = arith.constant 0 : index
    %208 = vector.load %arg8[%c0_39, %c0_40] : memref<80x32xbf16, #tpu.memory_space<vmem>>, vector<80x32xbf16>
    %cst_41 = arith.constant dense<0.000000e+00> : vector<2x32xf32>
    %209 = tpu.matmul %207, %208, %cst_41 {dimension_numbers = #tpu.dot_dimension_numbers<[1], [0], [0], [1], [0, 0, 1, 1], [], []>} : vector<2x80xbf16>, vector<80x32xbf16>, vector<2x32xf32> -> vector<2x32xf32>
    %c0_42 = arith.constant 0 : index
    %c0_43 = arith.constant 0 : index
    %210 = vector.load %arg9[%c0_42, %c0_43] : memref<1x32xf32, #tpu.memory_space<vmem>>, vector<1x32xf32>
    %211 = vector.broadcast %210 : vector<1x32xf32> to vector<2x32xf32>
    %212 = arith.addf %209, %211 : vector<2x32xf32>
    %cst_44 = arith.constant 0.000000e+00 : f32
    %213 = vector.broadcast %cst_44 : f32 to vector<2x32xf32>
    %214 = arith.maximumf %212, %213 : vector<2x32xf32>
    %c0_45 = arith.constant 0 : index
    %c0_46 = arith.constant 0 : index
    %215 = vector.load %arg10[%c0_45, %c0_46] : memref<1x32xf32, #tpu.memory_space<vmem>>, vector<1x32xf32>
    %216 = vector.broadcast %215 : vector<1x32xf32> to vector<2x32xf32>
    %217 = arith.mulf %214, %216 : vector<2x32xf32>
    %cst_47 = arith.constant dense<0.000000e+00> : vector<2xf32>
    %218 = vector.multi_reduction <add>, %217, %cst_47 [1] : vector<2x32xf32> to vector<2xf32>
    %219 = vector.shape_cast %218 : vector<2xf32> to vector<2x1xf32>
    %c0_48 = arith.constant 0 : index
    %c0_49 = arith.constant 0 : index
    %220 = vector.load %arg11[%c0_48, %c0_49] : memref<1x1xf32, #tpu.memory_space<vmem>>, vector<1x1xf32>
    %221 = vector.broadcast %220 : vector<1x1xf32> to vector<2x1xf32>
    %222 = arith.addf %219, %221 : vector<2x1xf32>
    %223 = arith.negf %222 : vector<2x1xf32>
    %224 = math.exp %223 : vector<2x1xf32>
    %cst_50 = arith.constant 1.000000e+00 : f32
    %225 = vector.broadcast %cst_50 : f32 to vector<2x1xf32>
    %226 = arith.addf %225, %224 : vector<2x1xf32>
    %227 = arith.divf %225, %226 : vector<2x1xf32>
    %c0_51 = arith.constant 0 : index
    %c0_52 = arith.constant 0 : index
    %228 = vector.load %arg12[%c0_51, %c0_52] : memref<2x1xf32, #tpu.memory_space<vmem>>, vector<2x1xf32>
    tpu.vector_store %arg12[%c0_51, %c0_52], %227 {strides = array<i32>} : memref<2x1xf32, #tpu.memory_space<vmem>>, vector<2x1xf32>,
    return
  }
  func.func @transform_0(%arg0: i32) -> (i32, i32) {
    %c0_i32 = arith.constant 0 : i32
    %c0_i32_0 = arith.constant 0 : i32
    return %arg0, %c0_i32 : i32, i32
  }
  func.func @transform_1(%arg0: i32) -> (i32, i32) {
    %c0_i32 = arith.constant 0 : i32
    %c0_i32_0 = arith.constant 0 : i32
    return %arg0, %c0_i32 : i32, i32
  }
  func.func @transform_2(%arg0: i32) -> (i32, i32) {
    %c0_i32 = arith.constant 0 : i32
    %c0_i32_0 = arith.constant 0 : i32
    return %arg0, %c0_i32 : i32, i32
  }
  func.func @transform_3(%arg0: i32) -> (i32, i32) {
    %c0_i32 = arith.constant 0 : i32
    %c0_i32_0 = arith.constant 0 : i32
    return %arg0, %c0_i32 : i32, i32
  }
  func.func @transform_4(%arg0: i32) -> (i32, i32) {
    %c0_i32 = arith.constant 0 : i32
    %c0_i32_0 = arith.constant 0 : i32
    %c0_i32_1 = arith.constant 0 : i32
    return %c0_i32, %c0_i32_0 : i32, i32
  }
  func.func @transform_5(%arg0: i32) -> (i32, i32) {
    %c0_i32 = arith.constant 0 : i32
    %c0_i32_0 = arith.constant 0 : i32
    %c0_i32_1 = arith.constant 0 : i32
    return %c0_i32, %c0_i32_0 : i32, i32
  }
  func.func @transform_6(%arg0: i32) -> (i32, i32) {
    %c0_i32 = arith.constant 0 : i32
    %c0_i32_0 = arith.constant 0 : i32
    %c0_i32_1 = arith.constant 0 : i32
    return %c0_i32, %c0_i32_0 : i32, i32
  }
  func.func @transform_7(%arg0: i32) -> (i32, i32) {
    %c0_i32 = arith.constant 0 : i32
    %c0_i32_0 = arith.constant 0 : i32
    %c0_i32_1 = arith.constant 0 : i32
    return %c0_i32, %c0_i32_0 : i32, i32
  }
  func.func @transform_8(%arg0: i32) -> (i32, i32) {
    %c0_i32 = arith.constant 0 : i32
    %c0_i32_0 = arith.constant 0 : i32
    %c0_i32_1 = arith.constant 0 : i32
    return %c0_i32, %c0_i32_0 : i32, i32
  }
  func.func @transform_9(%arg0: i32) -> (i32, i32) {
    %c0_i32 = arith.constant 0 : i32
    %c0_i32_0 = arith.constant 0 : i32
    %c0_i32_1 = arith.constant 0 : i32
    return %c0_i32, %c0_i32_0 : i32, i32
  }
  func.func @transform_10(%arg0: i32) -> (i32, i32) {
    %c0_i32 = arith.constant 0 : i32
    %c0_i32_0 = arith.constant 0 : i32
    %c0_i32_1 = arith.constant 0 : i32
    return %c0_i32, %c0_i32_0 : i32, i32
  }
  func.func @transform_11(%arg0: i32) -> (i32, i32) {
    %c0_i32 = arith.constant 0 : i32
    %c0_i32_0 = arith.constant 0 : i32
    return %arg0, %c0_i32 : i32, i32
  }
}

</mosaic_0001>

<llo_original>
// kernel: tpu_custom_call.1
$region0: #{tpu_custom_call.1}
  #allocation0 [shape = 'u32[]', space=smem, size = 0x4, offset = 0x4, fixed_abs, tag = 'smem constant byte address 0x4 - core index']
  #allocation1 [shape = 'u32[72,128]{1,0:T(1,128)}', space=vmem, size = 0x9000, scoped, tag = 'internal scratch']
  #allocation2 [shape = 'f32[1,1]{1,0:T(1,128)S(1)}', space=vmem, size = 0x200, scoped, tag = 'scoped memory for tpu_custom_call.1']
  %s0 = inlined_call_operand.vmem [shape: s32[2,8], index: 0, kind: input, shape index: {}]
  %s1 = inlined_call_operand.vmem [shape: s32[2,8], index: 1, kind: input, shape index: {}]
  %s2 = inlined_call_operand.vmem [shape: s32[2,1], index: 2, kind: input, shape index: {}]
  %s3 = inlined_call_operand.vmem [shape: f32[2,16], index: 3, kind: input, shape index: {}]
  %s4 = inlined_call_operand.vmem [shape: bf16[256,64], index: 4, kind: input, shape index: {}]
  %s5 = inlined_call_operand.vmem [shape: bf16[80,80], index: 5, kind: input, shape index: {}]
  %s6 = inlined_call_operand.vmem [shape: f32[1,80], index: 6, kind: input, shape index: {}]
  %s7 = inlined_call_operand.vmem [shape: bf16[80,32], index: 7, kind: input, shape index: {}]
  %s8 = inlined_call_operand.vmem [shape: f32[1,32], index: 8, kind: input, shape index: {}]
  %s9 = inlined_call_operand.vmem [shape: f32[1,32], index: 9, kind: input, shape index: {}]
  %s10 = inlined_call_operand.<no memory space> [shape: f32[1,1], index: 10, kind: input, shape index: {}]
  %s11 = inlined_call_operand.vmem [shape: f32[2,1], index: 11, kind: output, shape index: {}]
  %s12 = sld [smem:[#allocation0]]
  $region54: #{tpu_custom_call.1} parent=0
    _
  %s14 = ssub.s32 1, %s12
  %s15 = scalar_select 0, %s14, %s12
  %v16 = vstv %s10
  %17 = vst [vmem:[#allocation2] sm:$0x1] %v16
  // Predicated region
  $region2: #{tpu_custom_call.1} parent=0 // pred_check
    _
  $region3: #{tpu_custom_call.1} parent=0 // pred_check_branch
    %19 = sbr.rel (0) target = $region5
  $region4: #{tpu_custom_call.1} parent=0 // pred_region
    _
  $region5: #{tpu_custom_call.1} parent=0 // pred_fallthru
    _
  // Predicated region
  $region6: #{tpu_custom_call.1} parent=0 // pred_check
    _
  $region7: #{tpu_custom_call.1} parent=0 // pred_check_branch
    %21 = sbr.rel (0) target = $region9
  $region8: #{tpu_custom_call.1} parent=0 // pred_region
    _
  $region9: #{tpu_custom_call.1} parent=0 // pred_fallthru
    _
  // Predicated region
  $region10: #{tpu_custom_call.1} parent=0 // pred_check
    _
  $region11: #{tpu_custom_call.1} parent=0 // pred_check_branch
    %23 = sbr.rel (0) target = $region13
  $region12: #{tpu_custom_call.1} parent=0 // pred_region
    _
  $region13: #{tpu_custom_call.1} parent=0 // pred_fallthru
    _
  // Predicated region
  $region14: #{tpu_custom_call.1} parent=0 // pred_check
    _
  $region15: #{tpu_custom_call.1} parent=0 // pred_check_branch
    %25 = sbr.rel (0) target = $region17
  $region16: #{tpu_custom_call.1} parent=0 // pred_region
    _
  $region17: #{tpu_custom_call.1} parent=0 // pred_fallthru
    _
  // Predicated region
  $region18: #{tpu_custom_call.1} parent=0 // pred_check
    _
  $region19: #{tpu_custom_call.1} parent=0 // pred_check_branch
    %27 = sbr.rel (0) target = $region21
  $region20: #{tpu_custom_call.1} parent=0 // pred_region
    _
  $region21: #{tpu_custom_call.1} parent=0 // pred_fallthru
    _
  // Predicated region
  $region22: #{tpu_custom_call.1} parent=0 // pred_check
    _
  $region23: #{tpu_custom_call.1} parent=0 // pred_check_branch
    %29 = sbr.rel (0) target = $region25
  $region24: #{tpu_custom_call.1} parent=0 // pred_region
    _
  $region25: #{tpu_custom_call.1} parent=0 // pred_fallthru
    _
  // Predicated region
  $region26: #{tpu_custom_call.1} parent=0 // pred_check
    _
  $region27: #{tpu_custom_call.1} parent=0 // pred_check_branch
    %31 = sbr.rel (0) target = $region29
  $region28: #{tpu_custom_call.1} parent=0 // pred_region
    _
  $region29: #{tpu_custom_call.1} parent=0 // pred_fallthru
    _
  // Predicated region
  $region30: #{tpu_custom_call.1} parent=0 // pred_check
    _
  $region31: #{tpu_custom_call.1} parent=0 // pred_check_branch
    %33 = sbr.rel (0) target = $region33
  $region32: #{tpu_custom_call.1} parent=0 // pred_region
    _
  $region33: #{tpu_custom_call.1} parent=0 // pred_fallthru
    _
  // Predicated region
  $region34: #{tpu_custom_call.1} parent=0 // pred_check
    _
  $region35: #{tpu_custom_call.1} parent=0 // pred_check_branch
    %35 = sbr.rel (0) target = $region37
  $region36: #{tpu_custom_call.1} parent=0 // pred_region
    _
  $region37: #{tpu_custom_call.1} parent=0 // pred_fallthru
    _
  // Predicated region
  $region38: #{tpu_custom_call.1} parent=0 // pred_check
    _
  $region39: #{tpu_custom_call.1} parent=0 // pred_check_branch
    %37 = sbr.rel (0) target = $region41
  $region40: #{tpu_custom_call.1} parent=0 // pred_region
    _
  $region41: #{tpu_custom_call.1} parent=0 // pred_fallthru
    _
  // Predicated region
  $region42: #{tpu_custom_call.1} parent=0 // pred_check
    _
  $region43: #{tpu_custom_call.1} parent=0 // pred_check_branch
    %39 = sbr.rel (0) target = $region45
  $region44: #{tpu_custom_call.1} parent=0 // pred_region
    _
  $region45: #{tpu_custom_call.1} parent=0 // pred_fallthru
    _
  %v41 = vld [vmem:[%s0] sm:$0x3]
  %v42 = vld [vmem:[%s1] sm:$0x3]
  %v43 = vcvt.s32.f32 %v42
  %v44 = vld [vmem:[%s2] sm:$0x3]
  %v45 = vld [vmem:[%s3] sm:$0x3]
  %v46 = vlaneseq
  %v47 = vand.u32 %v46, 127
  %48 = vset.pattern.permute.xlu0 0
  %49 = vperm.xlu0 %48, %v41
  %v50 = vpop.permute.xlu0 %49
  %vm51 = vcmp.eq.s32.totalorder %v50, %v47
  %53 = vset.pattern.permute.xlu0 0
  %54 = vperm.xlu0 %53, %v43
  %v55 = vpop.permute.xlu0 %54
  %v57 = vsel %vm51, %v55, 0.0
  %v58 = vadd.f32 %v57, 0.0
  %vm59 = vcmp.gt.s32.totalorder %v44, 0
  %v60 = vsel %vm59, 1, 0
  %v61 = vcvt.s32.f32 %v60
  %63 = vset.pattern.permute.xlu0 0
  %64 = vperm.xlu0 %63, %v61
  %v65 = vpop.permute.xlu0 %64
  %v67 = vsel %vm51, %v65, 0.0
  %v68 = vadd.f32 %v67, 0.0
  %69 = vset.pattern.permute.xlu0 1
  %70 = vperm.xlu0 %69, %v41
  %v71 = vpop.permute.xlu0 %70
  %vm72 = vcmp.eq.s32.totalorder %v71, %v47
  %73 = vset.pattern.permute.xlu0 1
  %74 = vperm.xlu0 %73, %v43
  %v75 = vpop.permute.xlu0 %74
  %v77 = vsel %vm72, %v75, 0.0
  %v78 = vadd.f32 %v58, %v77
  %vm79 = vcmp.gt.s32.totalorder %v44, 1
  %v80 = vsel %vm79, 1, 0
  %v81 = vcvt.s32.f32 %v80
  %83 = vset.pattern.permute.xlu0 0
  %84 = vperm.xlu0 %83, %v81
  %v85 = vpop.permute.xlu0 %84
  %v87 = vsel %vm72, %v85, 0.0
  %v88 = vadd.f32 %v68, %v87
  %89 = vset.pattern.permute.xlu0 2
  %90 = vperm.xlu0 %89, %v41
  %v91 = vpop.permute.xlu0 %90
  %vm92 = vcmp.eq.s32.totalorder %v91, %v47
  %93 = vset.pattern.permute.xlu0 2
  %94 = vperm.xlu0 %93, %v43
  %v95 = vpop.permute.xlu0 %94
  %v97 = vsel %vm92, %v95, 0.0
  %v98 = vadd.f32 %v78, %v97
  %vm99 = vcmp.gt.s32.totalorder %v44, 2
  %v100 = vsel %vm99, 1, 0
  %v101 = vcvt.s32.f32 %v100
  %103 = vset.pattern.permute.xlu0 0
  %104 = vperm.xlu0 %103, %v101
  %v105 = vpop.permute.xlu0 %104
  %v107 = vsel %vm92, %v105, 0.0
  %v108 = vadd.f32 %v88, %v107
  %109 = vset.pattern.permute.xlu0 3
  %110 = vperm.xlu0 %109, %v41
  %v111 = vpop.permute.xlu0 %110
  %vm112 = vcmp.eq.s32.totalorder %v111, %v47
  %113 = vset.pattern.permute.xlu0 3
  %114 = vperm.xlu0 %113, %v43
  %v115 = vpop.permute.xlu0 %114
  %v117 = vsel %vm112, %v115, 0.0
  %v118 = vadd.f32 %v98, %v117
  %vm119 = vcmp.gt.s32.totalorder %v44, 3
  %v120 = vsel %vm119, 1, 0
  %v121 = vcvt.s32.f32 %v120
  %123 = vset.pattern.permute.xlu0 0
  %124 = vperm.xlu0 %123, %v121
  %v125 = vpop.permute.xlu0 %124
  %v127 = vsel %vm112, %v125, 0.0
  %v128 = vadd.f32 %v108, %v127
  %129 = vset.pattern.permute.xlu0 4
  %130 = vperm.xlu0 %129, %v41
  %v131 = vpop.permute.xlu0 %130
  %vm132 = vcmp.eq.s32.totalorder %v131, %v47
  %133 = vset.pattern.permute.xlu0 4
  %134 = vperm.xlu0 %133, %v43
  %v135 = vpop.permute.xlu0 %134
  %v137 = vsel %vm132, %v135, 0.0
  %v138 = vadd.f32 %v118, %v137
  %vm139 = vcmp.gt.s32.totalorder %v44, 4
  %v140 = vsel %vm139, 1, 0
  %v141 = vcvt.s32.f32 %v140
  %143 = vset.pattern.permute.xlu0 0
  %144 = vperm.xlu0 %143, %v141
  %v145 = vpop.permute.xlu0 %144
  %v147 = vsel %vm132, %v145, 0.0
  %v148 = vadd.f32 %v128, %v147
  %149 = vset.pattern.permute.xlu0 5
  %150 = vperm.xlu0 %149, %v41
  %v151 = vpop.permute.xlu0 %150
  %vm152 = vcmp.eq.s32.totalorder %v151, %v47
  %153 = vset.pattern.permute.xlu0 5
  %154 = vperm.xlu0 %153, %v43
  %v155 = vpop.permute.xlu0 %154
  %v157 = vsel %vm152, %v155, 0.0
  %v158 = vadd.f32 %v138, %v157
  %vm159 = vcmp.gt.s32.totalorder %v44, 5
  %v160 = vsel %vm159, 1, 0
  %v161 = vcvt.s32.f32 %v160
  %163 = vset.pattern.permute.xlu0 0
  %164 = vperm.xlu0 %163, %v161
  %v165 = vpop.permute.xlu0 %164
  %v167 = vsel %vm152, %v165, 0.0
  %v168 = vadd.f32 %v148, %v167
  %169 = vset.pattern.permute.xlu0 6
  %170 = vperm.xlu0 %169, %v41
  %v171 = vpop.permute.xlu0 %170
  %vm172 = vcmp.eq.s32.totalorder %v171, %v47
  %173 = vset.pattern.permute.xlu0 6
  %174 = vperm.xlu0 %173, %v43
  %v175 = vpop.permute.xlu0 %174
  %v177 = vsel %vm172, %v175, 0.0
  %v178 = vadd.f32 %v158, %v177
  %vm179 = vcmp.gt.s32.totalorder %v44, 6
  %v180 = vsel %vm179, 1, 0
  %v181 = vcvt.s32.f32 %v180
  %183 = vset.pattern.permute.xlu0 0
  %184 = vperm.xlu0 %183, %v181
  %v185 = vpop.permute.xlu0 %184
  %v187 = vsel %vm172, %v185, 0.0
  %v188 = vadd.f32 %v168, %v187
  %189 = vset.pattern.permute.xlu0 7
  %190 = vperm.xlu0 %189, %v41
  %v191 = vpop.permute.xlu0 %190
  %vm192 = vcmp.eq.s32.totalorder %v191, %v47
  %193 = vset.pattern.permute.xlu0 7
  %194 = vperm.xlu0 %193, %v43
  %v195 = vpop.permute.xlu0 %194
  %v197 = vsel %vm192, %v195, 0.0
  %v198 = vadd.f32 %v178, %v197
  %vm199 = vcmp.gt.s32.totalorder %v44, 7
  %v200 = vsel %vm199, 1, 0
  %v201 = vcvt.s32.f32 %v200
  %203 = vset.pattern.permute.xlu0 0
  %204 = vperm.xlu0 %203, %v201
  %v205 = vpop.permute.xlu0 %204
  %v207 = vsel %vm192, %v205, 0.0
  %v208 = vadd.f32 %v188, %v207
  %v209 = vpack.c.bf16 %v198, %v198
  %v210 = vpack.c.bf16 %v208, %v208
  %v211 = vld [vmem:[%s4] sm:$0xf]
  %v212 = vld [vmem:[%s4 + $0x4] sm:$0xf]
  %v213 = vld [vmem:[%s4 + $0x8] sm:$0xf]
  %v214 = vld [vmem:[%s4 + $0xc] sm:$0xf]
  %v215 = vld [vmem:[%s4 + $0x10] sm:$0xf]
  %v216 = vld [vmem:[%s4 + $0x14] sm:$0xf]
  %v217 = vld [vmem:[%s4 + $0x18] sm:$0xf]
  %v218 = vld [vmem:[%s4 + $0x1c] sm:$0xf]
  %v219 = vld [vmem:[%s4 + $0x20] sm:$0xf]
  %v220 = vld [vmem:[%s4 + $0x24] sm:$0xf]
  %v221 = vld [vmem:[%s4 + $0x28] sm:$0xf]
  %v222 = vld [vmem:[%s4 + $0x2c] sm:$0xf]
  %v223 = vld [vmem:[%s4 + $0x30] sm:$0xf]
  %v224 = vld [vmem:[%s4 + $0x34] sm:$0xf]
  %v225 = vld [vmem:[%s4 + $0x38] sm:$0xf]
  %v226 = vld [vmem:[%s4 + $0x3c] sm:$0xf]
  %v227 = vld [vmem:[%s4 + $0x40] sm:$0xf]
  %v228 = vld [vmem:[%s4 + $0x44] sm:$0xf]
  %v229 = vld [vmem:[%s4 + $0x48] sm:$0xf]
  %v230 = vld [vmem:[%s4 + $0x4c] sm:$0xf]
  %v231 = vld [vmem:[%s4 + $0x50] sm:$0xf]
  %v232 = vld [vmem:[%s4 + $0x54] sm:$0xf]
  %v233 = vld [vmem:[%s4 + $0x58] sm:$0xf]
  %v234 = vld [vmem:[%s4 + $0x5c] sm:$0xf]
  %v235 = vld [vmem:[%s4 + $0x60] sm:$0xf]
  %v236 = vld [vmem:[%s4 + $0x64] sm:$0xf]
  %v237 = vld [vmem:[%s4 + $0x68] sm:$0xf]
  %v238 = vld [vmem:[%s4 + $0x6c] sm:$0xf]
  %v239 = vld [vmem:[%s4 + $0x70] sm:$0xf]
  %v240 = vld [vmem:[%s4 + $0x74] sm:$0xf]
  %v241 = vld [vmem:[%s4 + $0x78] sm:$0xf]
  %v242 = vld [vmem:[%s4 + $0x7c] sm:$0xf]
  %v275 = vunpack.c.l.b16 %v211
  %v276 = vunpack.c.l.b16 %v212
  %v277 = vunpack.c.l.b16 %v213
  %v278 = vunpack.c.l.b16 %v214
  %v279 = vunpack.c.l.b16 %v215
  %v280 = vunpack.c.l.b16 %v216
  %v281 = vunpack.c.l.b16 %v217
  %v282 = vunpack.c.l.b16 %v218
  %v283 = vunpack.c.l.b16 %v219
  %v284 = vunpack.c.l.b16 %v220
  %v285 = vunpack.c.l.b16 %v221
  %v286 = vunpack.c.l.b16 %v222
  %v287 = vunpack.c.l.b16 %v223
  %v288 = vunpack.c.l.b16 %v224
  %v289 = vunpack.c.l.b16 %v225
  %v290 = vunpack.c.l.b16 %v226
  %v291 = vunpack.c.l.b16 %v227
  %v292 = vunpack.c.l.b16 %v228
  %v293 = vunpack.c.l.b16 %v229
  %v294 = vunpack.c.l.b16 %v230
  %v295 = vunpack.c.l.b16 %v231
  %v296 = vunpack.c.l.b16 %v232
  %v297 = vunpack.c.l.b16 %v233
  %v298 = vunpack.c.l.b16 %v234
  %v299 = vunpack.c.l.b16 %v235
  %v300 = vunpack.c.l.b16 %v236
  %v301 = vunpack.c.l.b16 %v237
  %v302 = vunpack.c.l.b16 %v238
  %v303 = vunpack.c.l.b16 %v239
  %v304 = vunpack.c.l.b16 %v240
  %v305 = vunpack.c.l.b16 %v241
  %v306 = vunpack.c.l.b16 %v242
  %v307 = vpack.c.b16 %v276, %v275
  %v308 = vpack.c.b16 %v278, %v277
  %v309 = vpack.c.b16 %v280, %v279
  %v310 = vpack.c.b16 %v282, %v281
  %v311 = vpack.c.b16 %v284, %v283
  %v312 = vpack.c.b16 %v286, %v285
  %v313 = vpack.c.b16 %v288, %v287
  %v314 = vpack.c.b16 %v290, %v289
  %v315 = vpack.c.b16 %v292, %v291
  %v316 = vpack.c.b16 %v294, %v293
  %v317 = vpack.c.b16 %v296, %v295
  %v318 = vpack.c.b16 %v298, %v297
  %v319 = vpack.c.b16 %v300, %v299
  %v320 = vpack.c.b16 %v302, %v301
  %v321 = vpack.c.b16 %v304, %v303
  %v322 = vpack.c.b16 %v306, %v305
  %339 = vmatpush.bf16.msra.mxu0 %v314
  %340 = vmatpush.bf16.msra.mxu0 %v313
  %341 = vmatpush.bf16.msra.mxu0 %v312
  %342 = vmatpush.bf16.msra.mxu0 %v311
  %343 = vmatpush.bf16.msra.mxu0 %v310
  %344 = vmatpush.bf16.msra.mxu0 %v309
  %345 = vmatpush.bf16.msra.mxu0 %v308
  %346 = vmatpush.bf16.msra.mxu0 %v307
  %347 = vmatmul.bf16.gmra.mxu0 %v209
  %v348 = vpop.f32.mrf.mxu0
  %v349 = vadd.f32 0.0, %v348
  %v350 = vpop.f32.mrf.mxu0
  %351 = vdwg.mxu0
  %352 = vmatpush.bf16.msra.mxu0 %v322
  %353 = vmatpush.bf16.msra.mxu0 %v321
  %354 = vmatpush.bf16.msra.mxu0 %v320
  %355 = vmatpush.bf16.msra.mxu0 %v319
  %356 = vmatpush.bf16.msra.mxu0 %v318
  %357 = vmatpush.bf16.msra.mxu0 %v317
  %358 = vmatpush.bf16.msra.mxu0 %v316
  %359 = vmatpush.bf16.msra.mxu0 %v315
  %360 = vmatmul.bf16.gmra.mxu0 %v210
  %v361 = vpop.f32.mrf.mxu0
  %v362 = vadd.f32 %v349, %v361
  %v363 = vpop.f32.mrf.mxu0
  %364 = vdwg.mxu0
  %366 = vrot.lane.b32.xlu0 %v45, 64
  %v367 = vpop.permute.xlu0 %366
  %vm369 = vcmask 523264
  %v370 = vsel %vm369, %v362, %v367
  %v371 = vpack.c.bf16 %v370, %v370
  %v372 = vld [vmem:[%s5] sm:$0xf]
  %v373 = vld [vmem:[%s5 + $0x4] sm:$0xf]
  %v374 = vld [vmem:[%s5 + $0x8] sm:$0xf]
  %v375 = vld [vmem:[%s5 + $0xc] sm:$0xf]
  %v376 = vld [vmem:[%s5 + $0x10] sm:$0xf]
  %v377 = vld [vmem:[%s5 + $0x14] sm:$0xf]
  %v378 = vld [vmem:[%s5 + $0x18] sm:$0xf]
  %v379 = vld [vmem:[%s5 + $0x1c] sm:$0xf]
  %v380 = vld [vmem:[%s5 + $0x20] sm:$0xf]
  %v381 = vld [vmem:[%s5 + $0x24] sm:$0xf]
  %v392 = vunpack.c.l.b16 %v372
  %v393 = vunpack.c.l.b16 %v373
  %v394 = vunpack.c.l.b16 %v374
  %v395 = vunpack.c.l.b16 %v375
  %v396 = vunpack.c.l.b16 %v376
  %v397 = vunpack.c.l.b16 %v377
  %v398 = vunpack.c.l.b16 %v378
  %v399 = vunpack.c.l.b16 %v379
  %v400 = vunpack.c.l.b16 %v380
  %v401 = vunpack.c.l.b16 %v381
  %v402 = vpack.c.b16 %v393, %v392
  %v403 = vpack.c.b16 %v395, %v394
  %v404 = vpack.c.b16 %v397, %v396
  %v405 = vpack.c.b16 %v399, %v398
  %v406 = vpack.c.b16 %v401, %v400
  %vm412 = vcmask 654336
  %v414 = vsel %vm412, %v371, 0
  %416 = vmatpush.bf16.msra.mxu0 0
  %417 = vmatpush.bf16.msra.mxu0 0
  %418 = vmatpush.bf16.msra.mxu0 0
  %419 = vmatpush.bf16.msra.mxu0 %v406
  %420 = vmatpush.bf16.msra.mxu0 %v405
  %421 = vmatpush.bf16.msra.mxu0 %v404
  %422 = vmatpush.bf16.msra.mxu0 %v403
  %423 = vmatpush.bf16.msra.mxu0 %v402
  %424 = vmatmul.bf16.gmra.mxu0 %v414
  %v425 = vpop.f32.mrf.mxu0
  %v426 = vadd.f32 0.0, %v425
  %v427 = vpop.f32.mrf.mxu0
  %428 = vdwg.mxu0
  %vm429 = vcmask 58368
  %v430 = vsel %vm429, %v43, 0.0
  %431 = vadd.xlane.f32.xlu0 %v430
  %v432 = vpop.xlane.xlu0 %431
  %v433 = vmax.f32 %v432, 1.0
  %v434 = vcvt.s32.f32 %v44
  %v435 = vmax.f32 %v434, 1.0
  %v436 = vmin.f32 %v435, 8.0
  %v437 = vrcp.pop %v433
  %v438 = vrcp.pop %v436
  %vm439 = vcmp.lt.s32.totalorder %v47, 32
  %vm440 = vcmp.lt.s32.totalorder %v47, 64
  %v441 = vsel %vm440, 1, 0
  %vm442 = vcmp.eq.s32.totalorder %v441, 1
  %444 = vset.pattern.permute.xlu0 0
  %445 = vperm.xlu0 %444, %v438
  %v446 = vpop.permute.xlu0 %445
  %v448 = vsel %vm442, %v446, 1.0
  %v449 = vsel %vm439, 1, 0
  %vm450 = vcmp.eq.s32.totalorder %v449, 1
  %v451 = vsel %vm450, %v437, %v448
  %v452 = vmul.f32 %v426, %v451
  %v453 = vld [vmem:[%s6] sm:$0x1]
  %v455 = vperm.slane %v453, 0
  %v457 = vadd.f32 %v452, %v455
  %v458 = vtanh.pop %v457
  %v459 = vmax.f32 %v457, 0.0
  %v460 = vsel %vm442, %v458, %v459
  %v461 = vpack.c.bf16 %v460, %v460
  %v462 = vld [vmem:[%s7] sm:$0xf]
  %v463 = vld [vmem:[%s7 + $0x4] sm:$0xf]
  %v464 = vld [vmem:[%s7 + $0x8] sm:$0xf]
  %v465 = vld [vmem:[%s7 + $0xc] sm:$0xf]
  %v466 = vld [vmem:[%s7 + $0x10] sm:$0xf]
  %v467 = vld [vmem:[%s7 + $0x14] sm:$0xf]
  %v468 = vld [vmem:[%s7 + $0x18] sm:$0xf]
  %v469 = vld [vmem:[%s7 + $0x1c] sm:$0xf]
  %v470 = vld [vmem:[%s7 + $0x20] sm:$0xf]
  %v471 = vld [vmem:[%s7 + $0x24] sm:$0xf]
  %v472 = vld [vmem:[%s8] sm:$0x1]
  %v474 = vperm.slane %v472, 0
  %v486 = vunpack.c.l.b16 %v462
  %v487 = vunpack.c.l.b16 %v463
  %v488 = vunpack.c.l.b16 %v464
  %v489 = vunpack.c.l.b16 %v465
  %v490 = vunpack.c.l.b16 %v466
  %v491 = vunpack.c.l.b16 %v467
  %v492 = vunpack.c.l.b16 %v468
  %v493 = vunpack.c.l.b16 %v469
  %v494 = vunpack.c.l.b16 %v470
  %v495 = vunpack.c.l.b16 %v471
  %v496 = vpack.c.b16 %v487, %v486
  %v497 = vpack.c.b16 %v489, %v488
  %v498 = vpack.c.b16 %v491, %v490
  %v499 = vpack.c.b16 %v493, %v492
  %v500 = vpack.c.b16 %v495, %v494
  %v507 = vsel %vm412, %v461, 0
  %509 = vmatpush.bf16.msra.mxu0 0
  %510 = vmatpush.bf16.msra.mxu0 0
  %511 = vmatpush.bf16.msra.mxu0 0
  %512 = vmatpush.bf16.msra.mxu0 %v500
  %513 = vmatpush.bf16.msra.mxu0 %v499
  %514 = vmatpush.bf16.msra.mxu0 %v498
  %515 = vmatpush.bf16.msra.mxu0 %v497
  %516 = vmatpush.bf16.msra.mxu0 %v496
  %517 = vmatmul.bf16.gmra.mxu0 %v507
  %v518 = vpop.f32.mrf.mxu0
  %v519 = vadd.f32 %v474, %v518
  %v520 = vpop.f32.mrf.mxu0
  %521 = vdwg.mxu0
  %v522 = vmax.f32 %v519, 0.0
  %v523 = vld [vmem:[%s9] sm:$0x1]
  %v525 = vperm.slane %v523, 0
  %v527 = vmul.f32 %v522, %v525
  %vm528 = vcmask 254976
  %v529 = vsel %vm528, %v527, 0.0
  %530 = vadd.xlane.f32.xlu0 %v529
  %v531 = vpop.xlane.xlu0 %530
  %v532 = vld [vmem:[#allocation2] sm:$0x1]
  %v534 = vperm.slane %v532, 0
  %v536 = vadd.f32 %v531, %v534
  %v537 = vxor.u32 %v536, 2147483648
  %v538 = vmul.f32 %v537, 1.442695
  %v539 = vpow.pop %v538
  %v540 = vadd.f32 %v539, 1.0
  %v541 = vrcp.pop %v540
  %v542 = vmul.f32 %v540, %v541
  %v543 = vsub.f32 1.0, %v542
  %v544 = vmul.f32 %v541, %v543
  %v545 = vadd.f32 %v541, %v544
  %vm546 = vweird.f32 %v540
  %vm547 = vweird.f32 %v541
  %vm548 = vmor %vm546, %vm547
  %v549 = vsel %vm548, %v541, %v545
  %v550 = vand.u32 2147483647, %v540
  %vm551 = vcmp.eq.f32.partialorder %v550, 8.507059e+37
  %v552 = vand.u32 %v540, 2147483648
  %v553 = vor.u32 1.1754944e-38, %v552
  %v554 = vsel %vm551, %v553, %v549
  %v555 = vmul.f32 1.0, %v554
  %vm556 = vcmask 1024
  %557 = vst.msk [vmem:[%s11] sm:$0x3] %vm556, %v555
  // Predicated region
  $region46: #{tpu_custom_call.1} parent=0 // pred_check
    _
  $region47: #{tpu_custom_call.1} parent=0 // pred_check_branch
    %559 = sbr.rel (0) target = $region49
  $region48: #{tpu_custom_call.1} parent=0 // pred_region
    _
  $region49: #{tpu_custom_call.1} parent=0 // pred_fallthru
    _
  // Predicated region
  $region50: #{tpu_custom_call.1} parent=0 // pred_check
    _
  $region51: #{tpu_custom_call.1} parent=0 // pred_check_branch
    %561 = sbr.rel (0) target = $region53
  $region52: #{tpu_custom_call.1} parent=0 // pred_region
    _
  $region53: #{tpu_custom_call.1} parent=0 // pred_fallthru
    _

</llo_original>
